<compile_context>
chip_gen: v5e
topology: v5e:2x2
jax: 0.10.0
libtpu: 0.0.40
codegen_flags: <defaults>
</compile_context>

<pallas_src>
import functools

import jax
import jax.numpy as jnp
from jax import lax
from jax.experimental import pallas as pl
from jax.experimental.pallas import tpu as pltpu


def _self_attn_kernel(x_ref, wv_ref, m_ref, gamma_ref, out_ref, *,
                      chunk_size, total_time, c_in):
    """One (batch, chunk) grid point.

    x_ref     : (1, 1, C+1, Tp)  zero-padded chunk + appended ones row (bias channel)
    wv_ref    : (C, C+1)         [Wv | bv]
    m_ref     : (C+1, C+1)       [Wq | bq]^T @ [Wk | bk]   (folded q/k projection)
    gamma_ref : (1,) in SMEM
    out_ref   : (1, 1, C, Tp)    gamma * attention + x (padded cols sliced off outside)
    """
    c = pl.program_id(1)
    # Valid (un-padded) time width of this chunk; chunk_size/total_time are static.
    valid = jnp.minimum(chunk_size, total_time - c * chunk_size)

    x_aug = x_ref[0, 0]                 # (C+1, Tp)
    x = x_aug[:c_in, :]                 # (C,  Tp)  real channels (residual path)

    # Fused value projection: v = Wv @ x + bv  (bias folded through the ones row).
    v = jnp.dot(wv_ref[...], x_aug, preferred_element_type=jnp.float32)      # (C, Tp)
    # The module contracts over the *query* index t when forming the output, so
    # padded time columns of v must contribute nothing.
    colv = lax.broadcasted_iota(jnp.int32, v.shape, 1)
    v = jnp.where(colv < valid, v, 0.0)

    # energy[t, s] = (Wq x[:,t] + bq) . (Wk x[:,s] + bk)
    #             = x_aug[:,t]^T (Wq_aug^T Wk_aug) x_aug[:,s]
    # -> two MXU matmuls with contraction depth C+1 instead of a depth-2 q^T k.
    kx = jnp.dot(m_ref[...], x_aug, preferred_element_type=jnp.float32)      # (C+1, Tp)
    energy = lax.dot_general(x_aug, kx, (((0,), (0,)), ((), ())),
                             preferred_element_type=jnp.float32)             # (Tp, Tp)

    # Mask padded key columns, then softmax over the last axis (matches
    # nn.Softmax(dim=-1), which is max-subtracted internally).
    tp = energy.shape[-1]
    col = lax.broadcasted_iota(jnp.int32, (tp, tp), 1)
    energy = jnp.where(col < valid, energy, -1e30)
    energy = energy - jnp.max(energy, axis=-1, keepdims=True)
    p = jnp.exp(energy)
    denom = jnp.sum(p, axis=-1, keepdims=True)
    attn = p * pl.reciprocal(denom, approx=False)                            # (Tp, Tp)

    # self_attention = bmm(v, attn):  sa[c, s] = sum_t v[c, t] * attn[t, s]
    sa = jnp.dot(v, attn, preferred_element_type=jnp.float32)                # (C, Tp)

    out_ref[0, 0] = (gamma_ref[0] * sa + x).astype(out_ref.dtype)


def self_attention_forward(x, params, chunk_size=100):
    """Reproduces SelfAttention.forward with one fused pallas_call over (B, chunks)."""
    wq, bq, wk, bk, wv, bv, gamma = params
    B, C, T = x.shape

    nc = -(-T // chunk_size)                       # number of NON-empty chunks
    tp = max(128, -(-chunk_size // 128) * 128)     # lane-dense padded chunk width

    # Fold biases via an appended ones channel; fold Wq/Wk into a (C+1, C+1) matrix.
    wq_aug = jnp.concatenate([wq, bq[:, None]], axis=1)      # (Cq, C+1)
    wk_aug = jnp.concatenate([wk, bk[:, None]], axis=1)      # (Cq, C+1)
    wv_aug = jnp.concatenate([wv, bv[:, None]], axis=1)      # (C,  C+1)
    m_qk = wq_aug.T @ wk_aug                                 # (C+1, C+1)

    # (B, C, T) -> zero-padded, chunked, lane-dense (B, nc, C+1, tp) with ones row.
    xp = jnp.pad(x, ((0, 0), (0, 0), (0, nc * chunk_size - T)))
    xp = xp.reshape(B, C, nc, chunk_size).transpose(0, 2, 1, 3)
    xp = jnp.pad(xp, ((0, 0), (0, 0), (0, 0), (0, tp - chunk_size)))
    x_aug = jnp.concatenate([xp, jnp.ones((B, nc, 1, tp), xp.dtype)], axis=2)

    kernel = functools.partial(_self_attn_kernel, chunk_size=chunk_size,
                               total_time=T, c_in=C)

    out_p = pl.pallas_call(
        kernel,
        out_shape=jax.ShapeDtypeStruct((B, nc, C, tp), x.dtype),
        grid_spec=pltpu.PrefetchScalarGridSpec(
            num_scalar_prefetch=0,
            grid=(B, nc),
            in_specs=[
                pl.BlockSpec((1, 1, C + 1, tp), lambda b, c: (b, c, 0, 0)),  # x chunk
                pl.BlockSpec((C, C + 1), lambda b, c: (0, 0)),               # [Wv|bv] (resident)
                pl.BlockSpec((C + 1, C + 1), lambda b, c: (0, 0)),           # folded Wq^T Wk
                pl.BlockSpec(memory_space=pltpu.MemorySpace.SMEM),           # gamma scalar
            ],
            out_specs=pl.BlockSpec((1, 1, C, tp), lambda b, c: (b, c, 0, 0)),
        ),
        compiler_params=pltpu.CompilerParams(
            dimension_semantics=("parallel", "parallel")),   # shards across 2 TCs on v7x
    )(x_aug, wv_aug, m_qk, gamma)

    # Undo padding/chunking: (B, nc, C, tp) -> (B, C, T)
    out = out_p[..., :chunk_size].transpose(0, 2, 1, 3).reshape(B, C, nc * chunk_size)
    return out[:, :, :T]


def self_attention_reference(x, params, chunk_size=100):
    """Pure-JAX reference mirroring the PyTorch forward exactly (per-chunk loop)."""
    wq, bq, wk, bk, wv, bv, gamma = params
    B, C, T = x.shape
    num_chunks = T // chunk_size + 1
    out = jnp.zeros_like(x)
    for i in range(num_chunks):
        start = chunk_size * i
        end = min(start + chunk_size, T)
        if end <= start:
            continue  # PyTorch's last chunk is empty when T % chunk_size == 0
        xc = x[:, :, start:end]
        q = jnp.einsum('oc,bct->bot', wq, xc) + bq[None, :, None]
        k = jnp.einsum('oc,bct->bot', wk, xc) + bk[None, :, None]
        v = jnp.einsum('oc,bct->bot', wv, xc) + bv[None, :, None]
        energy = jnp.einsum('bct,bcs->bts', q, k)
        attn = jax.nn.softmax(energy, axis=-1)
        sa = jnp.einsum('bct,bts->bcs', v, attn)
        out = out.at[:, :, start:end].set(sa)
    return gamma[0] * out + x


if __name__ == "__main__":
    # Small shapes implied by the module: (batch, in_channels, time);
    # in_channels must be >= 8 (query/key use in_channels // 8 channels).
    # T=130 exercises two chunks (100 + 30 remainder) and the padding/mask path.
    B, C, T = 2, 16, 130
    Cq = C // 8

    key = jax.random.PRNGKey(0)
    kx, kwq, kbq, kwk, kbk, kwv, kbv = jax.random.split(key, 7)

    x = jax.random.normal(kx, (B, C, T), dtype=jnp.float32)

    # Conv1d weights of shape (out, in, 1) with the kernel dim squeezed away.
    wq = 0.1 * jax.random.normal(kwq, (Cq, C), dtype=jnp.float32)
    bq = 0.1 * jax.random.normal(kbq, (Cq,), dtype=jnp.float32)
    wk = 0.1 * jax.random.normal(kwk, (Cq, C), dtype=jnp.float32)
    bk = 0.1 * jax.random.normal(kbk, (Cq,), dtype=jnp.float32)
    wv = 0.1 * jax.random.normal(kwv, (C, C), dtype=jnp.float32)
    bv = 0.1 * jax.random.normal(kbv, (C,), dtype=jnp.float32)
    # nn.Parameter(torch.zeros(1)) inits gamma = 0 (out == x); use a nonzero
    # deterministic value so the attention path is actually exercised.
    gamma = jnp.array([0.5], dtype=jnp.float32)

    params = (wq, bq, wk, bk, wv, bv, gamma)

    fwd = jax.jit(self_attention_forward)
    out = jax.block_until_ready(fwd(x, params))

    ref = self_attention_reference(x, params)
    assert out.shape == (B, C, T)
    err = jnp.max(jnp.abs(out - ref))
    assert jnp.allclose(out, ref, atol=1e-4, rtol=1e-4), f"mismatch vs reference, max err {err}"

    print("KERNEL_OK")
</pallas_src>

<mosaic_0001>
module attributes {stable_mosaic.version = 11 : i64} {
  func.func @_self_attn_kernel(%arg0: i32, %arg1: i32, %arg2: memref<1x1x17x128xf32, #tpu.memory_space<vmem>>, %arg3: memref<16x17xf32, #tpu.memory_space<vmem>>, %arg4: memref<17x17xf32, #tpu.memory_space<vmem>>, %arg5: memref<1xf32, #tpu.memory_space<smem>>, %arg6: memref<1x1x16x128xf32, #tpu.memory_space<vmem>>) attributes {dimension_semantics = [#tpu.dimension_semantics<parallel>, #tpu.dimension_semantics<parallel>], iteration_bounds = array<i64: 2, 2>, scalar_prefetch = 0 : i64, scratch_operands = 0 : i64, tpu.core_type = #tpu.core_type<tc>, window_params = [{transform_indices = @transform_0, window_bounds = array<i64: 1, 1, 17, 128>}, {pipeline_mode = #tpu.pipeline_mode<synchronous>, transform_indices = @transform_1, window_bounds = array<i64: 16, 17>}, {pipeline_mode = #tpu.pipeline_mode<synchronous>, transform_indices = @transform_2, window_bounds = array<i64: 17, 17>}, {transform_indices = @transform_3, window_bounds = array<i64: 1>}, {transform_indices = @transform_4, window_bounds = array<i64: 1, 1, 16, 128>}]} {
    %c100_i32 = arith.constant 100 : i32
    %0 = arith.muli %arg1, %c100_i32 : i32
    %c130_i32 = arith.constant 130 : i32
    %1 = arith.subi %c130_i32, %0 : i32
    %c100_i32_0 = arith.constant 100 : i32
    %2 = arith.minsi %c100_i32_0, %1 : i32
    %c0 = arith.constant 0 : index
    %c0_1 = arith.constant 0 : index
    %c0_2 = arith.constant 0 : index
    %c0_3 = arith.constant 0 : index
    %3 = vector.load %arg2[%c0, %c0_1, %c0_2, %c0_3] : memref<1x1x17x128xf32, #tpu.memory_space<vmem>>, vector<1x1x17x128xf32>
    %4 = vector.shape_cast %3 : vector<1x1x17x128xf32> to vector<17x128xf32>
    %5 = vector.extract_strided_slice %4 {offsets = [0, 0], sizes = [16, 128], strides = [1, 1]} : vector<17x128xf32> to vector<16x128xf32>
    %c0_4 = arith.constant 0 : index
    %c0_5 = arith.constant 0 : index
    %6 = vector.load %arg3[%c0_4, %c0_5] : memref<16x17xf32, #tpu.memory_space<vmem>>, vector<16x17xf32>
    %cst = arith.constant dense<0.000000e+00> : vector<16x128xf32>
    %7 = tpu.matmul %6, %4, %cst {dimension_numbers = #tpu.dot_dimension_numbers<[1], [0], [0], [1], [0, 0, 1, 1], [], []>} : vector<16x17xf32>, vector<17x128xf32>, vector<16x128xf32> -> vector<16x128xf32>
    %8 = tpu.iota {dimensions = array<i32: 1>} : vector<16x128xi32>
    %9 = vector.broadcast %2 : i32 to vector<16x128xi32>
    %10 = arith.cmpi slt, %8, %9 : vector<16x128xi32>
    %cst_6 = arith.constant 0.000000e+00 : f32
    %11 = vector.broadcast %cst_6 : f32 to vector<16x128xf32>
    %12 = arith.select %10, %7, %11 : vector<16x128xi1>, vector<16x128xf32>
    %c0_7 = arith.constant 0 : index
    %c0_8 = arith.constant 0 : index
    %13 = vector.load %arg4[%c0_7, %c0_8] : memref<17x17xf32, #tpu.memory_space<vmem>>, vector<17x17xf32>
    %cst_9 = arith.constant dense<0.000000e+00> : vector<17x128xf32>
    %14 = tpu.matmul %13, %4, %cst_9 {dimension_numbers = #tpu.dot_dimension_numbers<[1], [0], [0], [1], [0, 0, 1, 1], [], []>} : vector<17x17xf32>, vector<17x128xf32>, vector<17x128xf32> -> vector<17x128xf32>
    %cst_10 = arith.constant dense<0.000000e+00> : vector<128x128xf32>
    %15 = tpu.matmul %4, %14, %cst_10 {dimension_numbers = #tpu.dot_dimension_numbers<[0], [0], [1], [1], [0, 1, 1, 1], [], []>} : vector<17x128xf32>, vector<17x128xf32>, vector<128x128xf32> -> vector<128x128xf32>
    %16 = tpu.iota {dimensions = array<i32: 1>} : vector<128x128xi32>
    %17 = vector.broadcast %2 : i32 to vector<128x128xi32>
    %18 = arith.cmpi slt, %16, %17 : vector<128x128xi32>
    %cst_11 = arith.constant -1.000000e+30 : f32
    %19 = vector.broadcast %cst_11 : f32 to vector<128x128xf32>
    %20 = arith.select %18, %15, %19 : vector<128x128xi1>, vector<128x128xf32>
    %cst_12 = arith.constant dense<0xFF800000> : vector<128xf32>
    %21 = vector.multi_reduction <maximumf>, %20, %cst_12 [1] : vector<128x128xf32> to vector<128xf32>
    %22 = vector.shape_cast %21 : vector<128xf32> to vector<128x1xf32>
    %23 = vector.broadcast %22 : vector<128x1xf32> to vector<128x128xf32>
    %24 = arith.subf %20, %23 : vector<128x128xf32>
    %25 = math.exp %24 : vector<128x128xf32>
    %cst_13 = arith.constant dense<0.000000e+00> : vector<128xf32>
    %26 = vector.multi_reduction <add>, %25, %cst_13 [1] : vector<128x128xf32> to vector<128xf32>
    %27 = vector.shape_cast %26 : vector<128xf32> to vector<128x1xf32>
    %28 = tpu.reciprocal %27 : vector<128x1xf32> -> vector<128x1xf32>
    %29 = vector.broadcast %28 : vector<128x1xf32> to vector<128x128xf32>
    %30 = arith.mulf %25, %29 : vector<128x128xf32>
    %cst_14 = arith.constant dense<0.000000e+00> : vector<16x128xf32>
    %31 = tpu.matmul %12, %30, %cst_14 {dimension_numbers = #tpu.dot_dimension_numbers<[1], [0], [0], [1], [0, 0, 1, 1], [], []>} : vector<16x128xf32>, vector<128x128xf32>, vector<16x128xf32> -> vector<16x128xf32>
    %c0_15 = arith.constant 0 : index
    %32 = memref.load %arg5[%c0_15] : memref<1xf32, #tpu.memory_space<smem>>
    %33 = vector.broadcast %32 : f32 to vector<16x128xf32>
    %34 = arith.mulf %33, %31 : vector<16x128xf32>
    %35 = arith.addf %34, %5 : vector<16x128xf32>
    %c0_16 = arith.constant 0 : index
    %c0_17 = arith.constant 0 : index
    %c0_18 = arith.constant 0 : index
    %c0_19 = arith.constant 0 : index
    %36 = vector.load %arg6[%c0_16, %c0_17, %c0_18, %c0_19] : memref<1x1x16x128xf32, #tpu.memory_space<vmem>>, vector<1x1x16x128xf32>
    %37 = vector.shape_cast %36 : vector<1x1x16x128xf32> to vector<16x128xf32>
    %38 = vector.shape_cast %35 : vector<16x128xf32> to vector<1x1x16x128xf32>
    tpu.vector_store %arg6[%c0_16, %c0_17, %c0_18, %c0_19], %38 {strides = array<i32>} : memref<1x1x16x128xf32, #tpu.memory_space<vmem>>, vector<1x1x16x128xf32>,
    return
  }
  func.func @transform_0(%arg0: i32, %arg1: i32) -> (i32, i32, i32, i32) {
    %c0_i32 = arith.constant 0 : i32
    %c0_i32_0 = arith.constant 0 : i32
    %c0_i32_1 = arith.constant 0 : i32
    return %arg0, %arg1, %c0_i32, %c0_i32_0 : i32, i32, i32, i32
  }
  func.func @transform_1(%arg0: i32, %arg1: i32) -> (i32, i32) {
    %c0_i32 = arith.constant 0 : i32
    %c0_i32_0 = arith.constant 0 : i32
    %c0_i32_1 = arith.constant 0 : i32
    return %c0_i32, %c0_i32_0 : i32, i32
  }
  func.func @transform_2(%arg0: i32, %arg1: i32) -> (i32, i32) {
    %c0_i32 = arith.constant 0 : i32
    %c0_i32_0 = arith.constant 0 : i32
    %c0_i32_1 = arith.constant 0 : i32
    return %c0_i32, %c0_i32_0 : i32, i32
  }
  func.func @transform_3(%arg0: i32, %arg1: i32) -> i32 {
    %c0_i32 = arith.constant 0 : i32
    %c0_i32_0 = arith.constant 0 : i32
    return %c0_i32 : i32
  }
  func.func @transform_4(%arg0: i32, %arg1: i32) -> (i32, i32, i32, i32) {
    %c0_i32 = arith.constant 0 : i32
    %c0_i32_0 = arith.constant 0 : i32
    %c0_i32_1 = arith.constant 0 : i32
    return %arg0, %arg1, %c0_i32, %c0_i32_0 : i32, i32, i32, i32
  }
}

</mosaic_0001>

<llo_original>
// kernel: self_attention_forward.1
$region0: #{self_attention_forward.1}
  #allocation0 [shape = 'u32[]', space=smem, size = 0x4, offset = 0x4, fixed_abs, tag = 'smem constant byte address 0x4 - core index']
  #allocation1 [shape = 'u32[72,128]{1,0:T(1,128)}', space=vmem, size = 0x9000, scoped, tag = 'internal scratch']
  #allocation2 [shape = 'f32[1]{0:T(128)S(6)}', space=smem, size = 0x200, scoped, tag = 'scoped memory for self_attention_forward.1']
  %s0 = inlined_call_operand.vmem [shape: f32[2,2,17,128], index: 0, kind: input, shape index: {}]
  %s1 = inlined_call_operand.vmem [shape: f32[16,17], index: 1, kind: input, shape index: {}]
  %s2 = inlined_call_operand.vmem [shape: f32[17,17], index: 2, kind: input, shape index: {}]
  %s3 = inlined_call_operand.<no memory space> [shape: f32[1], index: 3, kind: input, shape index: {}]
  %s4 = inlined_call_operand.vmem [shape: f32[2,2,16,128], index: 4, kind: output, shape index: {}]
  %s5 = sld [smem:[#allocation0]]
  $region49: #{self_attention_forward.1} parent=0
    _
  %s7 = ssub.s32 1, %s5
  %s8 = scalar_select 0, %s7, %s5
  %9 = sst [smem:[#allocation2]] %s3
  loop: start=0, step=1, limit=6
  $region2: #{self_attention_forward.1} parent=0 // loop_pre_header
    _
  $region3: #{self_attention_forward.1} parent=0 // loop_header
    %s11 = sphi 0, %s15
    %p12 = scmp.ge.s32.totalorder %s11, 6
    %s18 = sphi 0, %s30
    %s19 = sphi 0, %s26
    %s20 = sphi 0, %s18
    %s21 = sphi 0, %s19
    %s22 = sphi 0, %s20
    %s23 = sphi 0, %s21
    %s35 = sphi 0, %s37
    %s38 = sphi 0, %s35
    %s39 = sphi 0, %s38
    %s55 = sphi 0, %s39
    %s59 = sphi 0, %s59
    %s61 = sphi 0, %s59
    %s62 = sphi 0, %s61
    %s76 = sphi 0, %s62
    %s80 = sphi 0, %s80
    %s82 = sphi 0, %s80
    %s83 = sphi 0, %s82
    %s97 = sphi 0, %s83
    %s101 = sphi 0, %s101
    %s103 = sphi 0, %s101
    %s104 = sphi 0, %s103
    %s118 = sphi 0, %s104
    %s126 = sphi 0, %s128
    %s129 = sphi 0, %s126
    %s130 = sphi 0, %s129
    %s146 = sphi 0, %s130
  $region4: #{self_attention_forward.1} parent=0 // loop_header_branch
    %14 = sbr.rel (%p12) target = $region8
  $region5: #{self_attention_forward.1} parent=0 // loop_body
    %s16 = ssub.s32 %s11, 1
    %s17 = ssub.s32 %s11, 2
    %s24 = sadd.s32 1, %s19
    %p25 = scmp.ge.s32.totalorder %s24, 2
    %s26 = scalar_select %p25, 0, %s24
    %s27 = sadd.s32 1, %s18
    %s28 = scalar_select %p25, %s27, %s18
    %p29 = scmp.ge.s32.totalorder %s28, 2
    %s30 = scalar_select %p29, 0, %s28
    %s31 = ssub.s32 %s18, %s30
    %s32 = ssub.s32 %s19, %s26
    %s33 = sor.u32 %s31, %s32
    %p34 = scmp.eq.s32.totalorder %s33, 0
    %s36 = sadd.s32 %s35, 1
    %s37 = scalar_select %p34, %s35, %s36
    %p40 = pneg %p34
    %p41 = scmp.eq.s32.totalorder %s11, 3
    %p42 = por %p40, %p41
    %p43 = scmp.ne.s32.totalorder %s35, %s38
    %p44 = scmp.eq.s32.totalorder %s11, 0
    %p45 = por %p43, %p44
    %p46 = scmp.ne.s32.totalorder %s35, %s38
    %p47 = scmp.eq.s32.totalorder %s16, 3
    %p48 = por %p46, %p47
    %p49 = scmp.ne.s32.totalorder %s38, %s39
    %p50 = scmp.eq.s32.totalorder %s16, 0
    %p51 = por %p49, %p50
    %p52 = scmp.ne.s32.totalorder %s38, %s39
    %p53 = scmp.eq.s32.totalorder %s17, 3
    %p54 = por %p52, %p53
    %p56 = scmp.ne.s32.totalorder %s39, %s55
    %p57 = scmp.eq.s32.totalorder %s17, 0
    %p58 = por %p56, %p57
    %s60 = sadd.s32 %s59, 1
    %p63 = scmp.eq.s32.totalorder %s11, 3
    %p64 = scmp.ne.s32.totalorder %s59, %s61
    %p65 = scmp.eq.s32.totalorder %s11, 0
    %p66 = por %p64, %p65
    %p67 = scmp.ne.s32.totalorder %s59, %s61
    %p68 = scmp.eq.s32.totalorder %s16, 3
    %p69 = por %p67, %p68
    %p70 = scmp.ne.s32.totalorder %s61, %s62
    %p71 = scmp.eq.s32.totalorder %s16, 0
    %p72 = por %p70, %p71
    %p73 = scmp.ne.s32.totalorder %s61, %s62
    %p74 = scmp.eq.s32.totalorder %s17, 3
    %p75 = por %p73, %p74
    %p77 = scmp.ne.s32.totalorder %s62, %s76
    %p78 = scmp.eq.s32.totalorder %s17, 0
    %p79 = por %p77, %p78
    %s81 = sadd.s32 %s80, 1
    %p84 = scmp.eq.s32.totalorder %s11, 3
    %p85 = scmp.ne.s32.totalorder %s80, %s82
    %p86 = scmp.eq.s32.totalorder %s11, 0
    %p87 = por %p85, %p86
    %p88 = scmp.ne.s32.totalorder %s80, %s82
    %p89 = scmp.eq.s32.totalorder %s16, 3
    %p90 = por %p88, %p89
    %p91 = scmp.ne.s32.totalorder %s82, %s83
    %p92 = scmp.eq.s32.totalorder %s16, 0
    %p93 = por %p91, %p92
    %p94 = scmp.ne.s32.totalorder %s82, %s83
    %p95 = scmp.eq.s32.totalorder %s17, 3
    %p96 = por %p94, %p95
    %p98 = scmp.ne.s32.totalorder %s83, %s97
    %p99 = scmp.eq.s32.totalorder %s17, 0
    %p100 = por %p98, %p99
    %s102 = sadd.s32 %s101, 1
    %p105 = scmp.eq.s32.totalorder %s11, 3
    %p106 = scmp.ne.s32.totalorder %s101, %s103
    %p107 = scmp.eq.s32.totalorder %s11, 0
    %p108 = por %p106, %p107
    %p109 = scmp.ne.s32.totalorder %s101, %s103
    %p110 = scmp.eq.s32.totalorder %s16, 3
    %p111 = por %p109, %p110
    %p112 = scmp.ne.s32.totalorder %s103, %s104
    %p113 = scmp.eq.s32.totalorder %s16, 0
    %p114 = por %p112, %p113
    %p115 = scmp.ne.s32.totalorder %s103, %s104
    %p116 = scmp.eq.s32.totalorder %s17, 3
    %p117 = por %p115, %p116
    %p119 = scmp.ne.s32.totalorder %s104, %s118
    %p120 = scmp.eq.s32.totalorder %s17, 0
    %p121 = por %p119, %p120
    %s122 = ssub.s32 %s18, %s30
    %s123 = ssub.s32 %s19, %s26
    %s124 = sor.u32 %s122, %s123
    %p125 = scmp.eq.s32.totalorder %s124, 0
    %s127 = sadd.s32 %s126, 1
    %s128 = scalar_select %p125, %s126, %s127
    %p131 = pneg %p125
    %p132 = scmp.eq.s32.totalorder %s11, 3
    %p133 = por %p131, %p132
    %p134 = scmp.ne.s32.totalorder %s126, %s129
    %p135 = scmp.eq.s32.totalorder %s11, 0
    %p136 = por %p134, %p135
    %p137 = scmp.ne.s32.totalorder %s126, %s129
    %p138 = scmp.eq.s32.totalorder %s16, 3
    %p139 = por %p137, %p138
    %p140 = scmp.ne.s32.totalorder %s129, %s130
    %p141 = scmp.eq.s32.totalorder %s16, 0
    %p142 = por %p140, %p141
    %p143 = scmp.ne.s32.totalorder %s129, %s130
    %p144 = scmp.eq.s32.totalorder %s17, 3
    %p145 = por %p143, %p144
    %p147 = scmp.ne.s32.totalorder %s130, %s146
    %p148 = scmp.eq.s32.totalorder %s17, 0
    %p149 = por %p147, %p148
    %p150 = scmp.le.s32.totalorder 1, %s11
    %p151 = scmp.lt.s32.totalorder %s11, 5
    %p152 = pnand %p150, %p151
    %p153 = pneg %p152
    // Predicated region
    $region9: #{self_attention_forward.1} parent=5 // pred_check
      _
    $region10: #{self_attention_forward.1} parent=5 // pred_check_branch
      %155 = sbr.rel (%p152) target = $region12
    $region11: #{self_attention_forward.1} parent=5 // pred_region
      %s156 = ssub.s32 %s11, 1
      // Predicated region
      $region13: #{self_attention_forward.1} parent=11 // pred_check
        %p157 = pneg %p72
      $region14: #{self_attention_forward.1} parent=11 // pred_check_branch
        %159 = sbr.rel (%p157) target = $region16
      $region15: #{self_attention_forward.1} parent=11 // pred_region
        _
      $region16: #{self_attention_forward.1} parent=11 // pred_fallthru
        _
      // Predicated region
      $region17: #{self_attention_forward.1} parent=11 // pred_check
        %p160 = pneg %p93
      $region18: #{self_attention_forward.1} parent=11 // pred_check_branch
        %162 = sbr.rel (%p160) target = $region20
      $region19: #{self_attention_forward.1} parent=11 // pred_region
        _
      $region20: #{self_attention_forward.1} parent=11 // pred_fallthru
        _
      // Predicated region
      $region21: #{self_attention_forward.1} parent=11 // pred_check
        %p163 = pneg %p114
      $region22: #{self_attention_forward.1} parent=11 // pred_check_branch
        %165 = sbr.rel (%p163) target = $region24
      $region23: #{self_attention_forward.1} parent=11 // pred_region
        _
      $region24: #{self_attention_forward.1} parent=11 // pred_fallthru
        _
    $region12: #{self_attention_forward.1} parent=5 // pred_fallthru
      _
    %p166 = scmp.lt.s32.totalorder %s11, 4
    // Predicated region
    $region25: #{self_attention_forward.1} parent=5 // pred_check
      %p167 = pneg %p166
    $region26: #{self_attention_forward.1} parent=5 // pred_check_branch
      %169 = sbr.rel (%p167) target = $region28
    $region27: #{self_attention_forward.1} parent=5 // pred_region
      // Predicated region
      $region29: #{self_attention_forward.1} parent=27 // pred_check
        %p170 = pneg %p45
      $region30: #{self_attention_forward.1} parent=27 // pred_check_branch
        %172 = sbr.rel (%p170) target = $region32
      $region31: #{self_attention_forward.1} parent=27 // pred_region
        %p173 = scmp.lt.s32.totalorder %s18, 1
        %s174 = scalar_select %p173, %s18, 1
        %p175 = scmp.lt.s32.totalorder %s19, 1
        %s176 = scalar_select %p175, %s19, 1
        %s177 = smul.addr %s176, 3
        %s178 = smul.addr %s174, 6
        %s179 = sadd.s32 %s177, %s178
        %s180 = smul.addr %s179, 8
        %s181 = scalar_lea.vmem %s0, %s180
      $region32: #{self_attention_forward.1} parent=27 // pred_fallthru
        _
    $region28: #{self_attention_forward.1} parent=5 // pred_fallthru
      _
    %p182 = scmp.le.s32.totalorder 1, %s11
    %p183 = scmp.lt.s32.totalorder %s11, 5
    %p184 = pnand %p182, %p183
    %p185 = pneg %p184
    // Predicated region
    $region33: #{self_attention_forward.1} parent=5 // pred_check
      _
    $region34: #{self_attention_forward.1} parent=5 // pred_check_branch
      %187 = sbr.rel (%p184) target = $region36
    $region35: #{self_attention_forward.1} parent=5 // pred_region
      %s188 = ssub.s32 %s11, 1
      %p189 = scmp.lt.s32.totalorder %s20, 1
      %s190 = scalar_select %p189, %s20, 1
      %p191 = scmp.lt.s32.totalorder %s21, 1
      %s192 = scalar_select %p191, %s21, 1
      %s193 = smul.addr %s192, 3
      %s194 = smul.addr %s190, 6
      %s195 = sadd.s32 %s193, %s194
      %s196 = smul.addr %s195, 8
      %s197 = scalar_lea.vmem %s0, %s196
      %p198 = pneg %p51
      %p199 = pneg %p48
      %p200 = pneg %p72
      %p201 = pneg %p69
      %p202 = pneg %p93
      %p203 = pneg %p90
      %p204 = pneg %p114
      %p205 = pneg %p111
      %p206 = pneg %p142
      %p207 = pneg %p139
      %p208 = scmp.lt.s32.totalorder %s20, 1
      %s209 = scalar_select %p208, %s20, 1
      %p210 = scmp.lt.s32.totalorder %s21, 1
      %s211 = scalar_select %p210, %s21, 1
      %s212 = smul.addr %s211, 2
      %s213 = smul.addr %s209, 4
      %s214 = sadd.s32 %s212, %s213
      %s215 = smul.addr %s214, 8
      %s216 = scalar_lea.vmem %s4, %s215
      %p217 = scmp.lt.s32.totalorder %s20, 1
      %s218 = scalar_select %p217, %s20, 1
      %p219 = scmp.lt.s32.totalorder %s21, 1
      %s220 = scalar_select %p219, %s21, 1
      %s221 = smul.addr %s220, 3
      %s222 = smul.addr %s218, 6
      %s223 = sadd.s32 %s221, %s222
      %s224 = smul.addr %s223, 8
      %s225 = scalar_lea.vmem %s0, %s224
      %p226 = scmp.lt.s32.totalorder %s20, 1
      %s227 = scalar_select %p226, %s20, 1
      %p228 = scmp.lt.s32.totalorder %s21, 1
      %s229 = scalar_select %p228, %s21, 1
      %s230 = smul.addr %s229, 2
      %s231 = smul.addr %s227, 4
      %s232 = sadd.s32 %s230, %s231
      %s233 = smul.addr %s232, 8
      %s234 = scalar_lea.vmem %s4, %s233
      %s235 = smul.u32 %s21, 100
      %s236 = ssub.s32 130, %s235
      %p237 = scmp.lt.s32.totalorder %s236, 100
      %s238 = scalar_select %p237, %s236, 100
      %v239 = vld [vmem:[%s225] sm:$0xff]
      %v240 = vld [vmem:[%s225 + $0x8] sm:$0xff]
      %v241 = vld [vmem:[%s225 + $0x10] sm:$0x1]
      %v242 = vld [vmem:[%s1] sm:$0xff]
      %v243 = vld [vmem:[%s1 + $0x8] sm:$0xff]
      %vm244 = vcmask 138240
      %v246 = vsel %vm244, %v242, 0
      %v249 = vsel %vm244, %v243, 0
      %vm251 = vcmask 1040384
      %v253 = vsel %vm251, %v241, 0
      %255 = vmatpush.msra.mxu0 0.0
      %256 = vmatpush.msra.mxu0 0.0
      %257 = vmatpush.msra.mxu0 0.0
      %258 = vmatpush.msra.mxu0 0.0
      %259 = vmatpush.msra.mxu0 0.0
      %260 = vmatpush.msra.mxu0 0.0
      %261 = vmatpush.msra.mxu0 0.0
      %262 = vmatpush.msra.mxu0 0.0
      %263 = vmatpush.msra.mxu0 0.0
      %264 = vmatpush.msra.mxu0 0.0
      %265 = vmatpush.msra.mxu0 0.0
      %266 = vmatpush.msra.mxu0 0.0
      %267 = vmatpush.msra.mxu0 0.0
      %268 = vmatpush.msra.mxu0 %v253
      %269 = vmatpush.msra.mxu0 %v240
      %270 = vmatpush.msra.mxu0 %v239
      %271 = vmatmul.f32.gmra.mxu0 %v246
      %v272 = vpop.f32.mrf.mxu0
      %v273 = vadd.f32 0.0, %v272
      %274 = vmatmul.f32.gmra.mxu0 %v249
      %v275 = vpop.f32.mrf.mxu0
      %v276 = vadd.f32 0.0, %v275
      %277 = vdwg.mxu0
      %v278 = vlaneseq
      %v279 = vand.u32 %v278, 127
      %v280 = vstv %s238
      %vm281 = vcmp.lt.s32.totalorder %v279, %v280
      %v282 = vsel %vm281, %v273, 0.0
      %v283 = vsel %vm281, %v276, 0.0
      %v284 = vld [vmem:[%s2] sm:$0xff]
      %v285 = vld [vmem:[%s2 + $0x8] sm:$0xff]
      %v286 = vld [vmem:[%s2 + $0x10] sm:$0x1]
      %v288 = vsel %vm244, %v284, 0
      %v291 = vsel %vm244, %v285, 0
      %v294 = vsel %vm244, %v286, 0
      %296 = vmatpush.msra.mxu0 0.0
      %297 = vmatpush.msra.mxu0 0.0
      %298 = vmatpush.msra.mxu0 0.0
      %299 = vmatpush.msra.mxu0 0.0
      %300 = vmatpush.msra.mxu0 0.0
      %301 = vmatpush.msra.mxu0 0.0
      %302 = vmatpush.msra.mxu0 0.0
      %303 = vmatpush.msra.mxu0 0.0
      %304 = vmatpush.msra.mxu0 0.0
      %305 = vmatpush.msra.mxu0 0.0
      %306 = vmatpush.msra.mxu0 0.0
      %307 = vmatpush.msra.mxu0 0.0
      %308 = vmatpush.msra.mxu0 0.0
      %309 = vmatpush.msra.mxu0 %v253
      %310 = vmatpush.msra.mxu0 %v240
      %311 = vmatpush.msra.mxu0 %v239
      %312 = vmatmul.f32.gmra.mxu0 %v288
      %v313 = vpop.f32.mrf.mxu0
      %v314 = vadd.f32 0.0, %v313
      %315 = vmatmul.f32.gmra.mxu0 %v291
      %v316 = vpop.f32.mrf.mxu0
      %v317 = vadd.f32 0.0, %v316
      %318 = vmatmul.f32.gmra.mxu0 %v294
      %v319 = vpop.f32.mrf.mxu0
      %v320 = vadd.f32 0.0, %v319
      %321 = vdwg.mxu0
      %322 = vxpose.xlu0.b32.start [1/16] %v239, 128
      %323 = vxpose.xlu0.b32.cont [2/16] %v240, 128
      %324 = vxpose.xlu0.b32.cont [3/16] %v241, 128
      %325 = vxpose.xlu0.b32.cont [4/16] 0.0, 128
      %326 = vxpose.xlu0.b32.cont [5/16] 0.0, 128
      %327 = vxpose.xlu0.b32.cont [6/16] 0.0, 128
      %328 = vxpose.xlu0.b32.cont [7/16] 0.0, 128
      %329 = vxpose.xlu0.b32.cont [8/16] 0.0, 128
      %330 = vxpose.xlu0.b32.cont [9/16] 0.0, 128
      %331 = vxpose.xlu0.b32.cont [10/16] 0.0, 128
      %332 = vxpose.xlu0.b32.cont [11/16] 0.0, 128
      %333 = vxpose.xlu0.b32.cont [12/16] 0.0, 128
      %334 = vxpose.xlu0.b32.cont [13/16] 0.0, 128
      %335 = vxpose.xlu0.b32.cont [14/16] 0.0, 128
      %336 = vxpose.xlu0.b32.cont [15/16] 0.0, 128
      %337 = vxpose.xlu0.b32.end [16/16] 0.0, 128
      %v338 = vpop.trf.xlu0
      %v339 = vpop.trf.xlu0
      %v340 = vpop.trf.xlu0
      %v341 = vpop.trf.xlu0
      %v342 = vpop.trf.xlu0
      %v343 = vpop.trf.xlu0
      %v344 = vpop.trf.xlu0
      %v345 = vpop.trf.xlu0
      %v346 = vpop.trf.xlu0
      %v347 = vpop.trf.xlu0
      %v348 = vpop.trf.xlu0
      %v349 = vpop.trf.xlu0
      %v350 = vpop.trf.xlu0
      %v351 = vpop.trf.xlu0
      %v352 = vpop.trf.xlu0
      %v353 = vpop.trf.xlu0
      %v355 = vsel %vm244, %v338, 0
      %v358 = vsel %vm244, %v339, 0
      %v361 = vsel %vm244, %v340, 0
      %v364 = vsel %vm244, %v341, 0
      %v367 = vsel %vm244, %v342, 0
      %v370 = vsel %vm244, %v343, 0
      %v373 = vsel %vm244, %v344, 0
      %v376 = vsel %vm244, %v345, 0
      %v379 = vsel %vm244, %v346, 0
      %v382 = vsel %vm244, %v347, 0
      %v385 = vsel %vm244, %v348, 0
      %v388 = vsel %vm244, %v349, 0
      %v391 = vsel %vm244, %v350, 0
      %v394 = vsel %vm244, %v351, 0
      %v397 = vsel %vm244, %v352, 0
      %v400 = vsel %vm244, %v353, 0
      %v403 = vsel %vm251, %v320, 0
      %405 = vmatpush.msra.mxu0 0.0
      %406 = vmatpush.msra.mxu0 0.0
      %407 = vmatpush.msra.mxu0 0.0
      %408 = vmatpush.msra.mxu0 0.0
      %409 = vmatpush.msra.mxu0 0.0
      %410 = vmatpush.msra.mxu0 0.0
      %411 = vmatpush.msra.mxu0 0.0
      %412 = vmatpush.msra.mxu0 0.0
      %413 = vmatpush.msra.mxu0 0.0
      %414 = vmatpush.msra.mxu0 0.0
      %415 = vmatpush.msra.mxu0 0.0
      %416 = vmatpush.msra.mxu0 0.0
      %417 = vmatpush.msra.mxu0 0.0
      %418 = vmatpush.msra.mxu0 %v403
      %419 = vmatpush.msra.mxu0 %v317
      %420 = vmatpush.msra.mxu0 %v314
      %421 = vmatmul.f32.gmra.mxu0 %v355
      %v422 = vpop.f32.mrf.mxu0
      %v423 = vadd.f32 0.0, %v422
      %424 = vmatmul.f32.gmra.mxu0 %v358
      %v425 = vpop.f32.mrf.mxu0
      %v426 = vadd.f32 0.0, %v425
      %427 = vmatmul.f32.gmra.mxu0 %v361
      %v428 = vpop.f32.mrf.mxu0
      %v429 = vadd.f32 0.0, %v428
      %430 = vmatmul.f32.gmra.mxu0 %v364
      %v431 = vpop.f32.mrf.mxu0
      %v432 = vadd.f32 0.0, %v431
      %433 = vmatmul.f32.gmra.mxu0 %v367
      %v434 = vpop.f32.mrf.mxu0
      %v435 = vadd.f32 0.0, %v434
      %436 = vmatmul.f32.gmra.mxu0 %v370
      %v437 = vpop.f32.mrf.mxu0
      %v438 = vadd.f32 0.0, %v437
      %439 = vmatmul.f32.gmra.mxu0 %v373
      %v440 = vpop.f32.mrf.mxu0
      %v441 = vadd.f32 0.0, %v440
      %442 = vmatmul.f32.gmra.mxu0 %v376
      %v443 = vpop.f32.mrf.mxu0
      %v444 = vadd.f32 0.0, %v443
      %445 = vmatmul.f32.gmra.mxu0 %v379
      %v446 = vpop.f32.mrf.mxu0
      %v447 = vadd.f32 0.0, %v446
      %448 = vmatmul.f32.gmra.mxu0 %v382
      %v449 = vpop.f32.mrf.mxu0
      %v450 = vadd.f32 0.0, %v449
      %451 = vmatmul.f32.gmra.mxu0 %v385
      %v452 = vpop.f32.mrf.mxu0
      %v453 = vadd.f32 0.0, %v452
      %454 = vmatmul.f32.gmra.mxu0 %v388
      %v455 = vpop.f32.mrf.mxu0
      %v456 = vadd.f32 0.0, %v455
      %457 = vmatmul.f32.gmra.mxu0 %v391
      %v458 = vpop.f32.mrf.mxu0
      %v459 = vadd.f32 0.0, %v458
      %460 = vmatmul.f32.gmra.mxu0 %v394
      %v461 = vpop.f32.mrf.mxu0
      %v462 = vadd.f32 0.0, %v461
      %463 = vmatmul.f32.gmra.mxu0 %v397
      %v464 = vpop.f32.mrf.mxu0
      %v465 = vadd.f32 0.0, %v464
      %466 = vmatmul.f32.gmra.mxu0 %v400
      %v467 = vpop.f32.mrf.mxu0
      %v468 = vadd.f32 0.0, %v467
      %469 = vdwg.mxu0
      %v470 = vsel %vm281, %v423, -1e+30
      %v471 = vsel %vm281, %v426, -1e+30
      %v472 = vsel %vm281, %v429, -1e+30
      %v473 = vsel %vm281, %v432, -1e+30
      %v474 = vsel %vm281, %v435, -1e+30
      %v475 = vsel %vm281, %v438, -1e+30
      %v476 = vsel %vm281, %v441, -1e+30
      %v477 = vsel %vm281, %v444, -1e+30
      %v478 = vsel %vm281, %v447, -1e+30
      %v479 = vsel %vm281, %v450, -1e+30
      %v480 = vsel %vm281, %v453, -1e+30
      %v481 = vsel %vm281, %v456, -1e+30
      %v482 = vsel %vm281, %v459, -1e+30
      %v483 = vsel %vm281, %v462, -1e+30
      %v484 = vsel %vm281, %v465, -1e+30
      %v485 = vsel %vm281, %v468, -1e+30
      %486 = vmax.xlane.f32.xlu0 %v470
      %v487 = vpop.xlane.xlu0 %486
      %488 = vmax.xlane.f32.xlu0 %v471
      %v489 = vpop.xlane.xlu0 %488
      %490 = vmax.xlane.f32.xlu0 %v472
      %v491 = vpop.xlane.xlu0 %490
      %492 = vmax.xlane.f32.xlu0 %v473
      %v493 = vpop.xlane.xlu0 %492
      %494 = vmax.xlane.f32.xlu0 %v474
      %v495 = vpop.xlane.xlu0 %494
      %496 = vmax.xlane.f32.xlu0 %v475
      %v497 = vpop.xlane.xlu0 %496
      %498 = vmax.xlane.f32.xlu0 %v476
      %v499 = vpop.xlane.xlu0 %498
      %500 = vmax.xlane.f32.xlu0 %v477
      %v501 = vpop.xlane.xlu0 %500
      %502 = vmax.xlane.f32.xlu0 %v478
      %v503 = vpop.xlane.xlu0 %502
      %504 = vmax.xlane.f32.xlu0 %v479
      %v505 = vpop.xlane.xlu0 %504
      %506 = vmax.xlane.f32.xlu0 %v480
      %v507 = vpop.xlane.xlu0 %506
      %508 = vmax.xlane.f32.xlu0 %v481
      %v509 = vpop.xlane.xlu0 %508
      %510 = vmax.xlane.f32.xlu0 %v482
      %v511 = vpop.xlane.xlu0 %510
      %512 = vmax.xlane.f32.xlu0 %v483
      %v513 = vpop.xlane.xlu0 %512
      %514 = vmax.xlane.f32.xlu0 %v484
      %v515 = vpop.xlane.xlu0 %514
      %516 = vmax.xlane.f32.xlu0 %v485
      %v517 = vpop.xlane.xlu0 %516
      %v518 = vsub.f32 %v470, %v487
      %v519 = vsub.f32 %v471, %v489
      %v520 = vsub.f32 %v472, %v491
      %v521 = vsub.f32 %v473, %v493
      %v522 = vsub.f32 %v474, %v495
      %v523 = vsub.f32 %v475, %v497
      %v524 = vsub.f32 %v476, %v499
      %v525 = vsub.f32 %v477, %v501
      %v526 = vsub.f32 %v478, %v503
      %v527 = vsub.f32 %v479, %v505
      %v528 = vsub.f32 %v480, %v507
      %v529 = vsub.f32 %v481, %v509
      %v530 = vsub.f32 %v482, %v511
      %v531 = vsub.f32 %v483, %v513
      %v532 = vsub.f32 %v484, %v515
      %v533 = vsub.f32 %v485, %v517
      %v534 = vmul.f32 %v518, 1.442695
      %v535 = vpow.pop %v534
      %v536 = vmul.f32 %v519, 1.442695
      %v537 = vpow.pop %v536
      %v538 = vmul.f32 %v520, 1.442695
      %v539 = vpow.pop %v538
      %v540 = vmul.f32 %v521, 1.442695
      %v541 = vpow.pop %v540
      %v542 = vmul.f32 %v522, 1.442695
      %v543 = vpow.pop %v542
      %v544 = vmul.f32 %v523, 1.442695
      %v545 = vpow.pop %v544
      %v546 = vmul.f32 %v524, 1.442695
      %v547 = vpow.pop %v546
      %v548 = vmul.f32 %v525, 1.442695
      %v549 = vpow.pop %v548
      %v550 = vmul.f32 %v526, 1.442695
      %v551 = vpow.pop %v550
      %v552 = vmul.f32 %v527, 1.442695
      %v553 = vpow.pop %v552
      %v554 = vmul.f32 %v528, 1.442695
      %v555 = vpow.pop %v554
      %v556 = vmul.f32 %v529, 1.442695
      %v557 = vpow.pop %v556
      %v558 = vmul.f32 %v530, 1.442695
      %v559 = vpow.pop %v558
      %v560 = vmul.f32 %v531, 1.442695
      %v561 = vpow.pop %v560
      %v562 = vmul.f32 %v532, 1.442695
      %v563 = vpow.pop %v562
      %v564 = vmul.f32 %v533, 1.442695
      %v565 = vpow.pop %v564
      %566 = vadd.xlane.f32.xlu0 %v535
      %v567 = vpop.xlane.xlu0 %566
      %568 = vadd.xlane.f32.xlu0 %v537
      %v569 = vpop.xlane.xlu0 %568
      %570 = vadd.xlane.f32.xlu0 %v539
      %v571 = vpop.xlane.xlu0 %570
      %572 = vadd.xlane.f32.xlu0 %v541
      %v573 = vpop.xlane.xlu0 %572
      %574 = vadd.xlane.f32.xlu0 %v543
      %v575 = vpop.xlane.xlu0 %574
      %576 = vadd.xlane.f32.xlu0 %v545
      %v577 = vpop.xlane.xlu0 %576
      %578 = vadd.xlane.f32.xlu0 %v547
      %v579 = vpop.xlane.xlu0 %578
      %580 = vadd.xlane.f32.xlu0 %v549
      %v581 = vpop.xlane.xlu0 %580
      %582 = vadd.xlane.f32.xlu0 %v551
      %v583 = vpop.xlane.xlu0 %582
      %584 = vadd.xlane.f32.xlu0 %v553
      %v585 = vpop.xlane.xlu0 %584
      %586 = vadd.xlane.f32.xlu0 %v555
      %v587 = vpop.xlane.xlu0 %586
      %588 = vadd.xlane.f32.xlu0 %v557
      %v589 = vpop.xlane.xlu0 %588
      %590 = vadd.xlane.f32.xlu0 %v559
      %v591 = vpop.xlane.xlu0 %590
      %592 = vadd.xlane.f32.xlu0 %v561
      %v593 = vpop.xlane.xlu0 %592
      %594 = vadd.xlane.f32.xlu0 %v563
      %v595 = vpop.xlane.xlu0 %594
      %596 = vadd.xlane.f32.xlu0 %v565
      %v597 = vpop.xlane.xlu0 %596
      %v598 = vrcp.pop %v567
      %v599 = vmul.f32 %v567, %v598
      %v600 = vsub.f32 1.0, %v599
      %v601 = vmul.f32 %v598, %v600
      %v602 = vadd.f32 %v598, %v601
      %vm603 = vweird.f32 %v567
      %vm604 = vweird.f32 %v598
      %vm605 = vmor %vm603, %vm604
      %v606 = vsel %vm605, %v598, %v602
      %v607 = vand.u32 2147483647, %v567
      %vm608 = vcmp.eq.f32.partialorder %v607, 8.507059e+37
      %v609 = vand.u32 %v567, 2147483648
      %v610 = vor.u32 1.1754944e-38, %v609
      %v611 = vsel %vm608, %v610, %v606
      %v612 = vrcp.pop %v569
      %v613 = vmul.f32 %v569, %v612
      %v614 = vsub.f32 1.0, %v613
      %v615 = vmul.f32 %v612, %v614
      %v616 = vadd.f32 %v612, %v615
      %vm617 = vweird.f32 %v569
      %vm618 = vweird.f32 %v612
      %vm619 = vmor %vm617, %vm618
      %v620 = vsel %vm619, %v612, %v616
      %v621 = vand.u32 2147483647, %v569
      %vm622 = vcmp.eq.f32.partialorder %v621, 8.507059e+37
      %v623 = vand.u32 %v569, 2147483648
      %v624 = vor.u32 1.1754944e-38, %v623
      %v625 = vsel %vm622, %v624, %v620
      %v626 = vrcp.pop %v571
      %v627 = vmul.f32 %v571, %v626
      %v628 = vsub.f32 1.0, %v627
      %v629 = vmul.f32 %v626, %v628
      %v630 = vadd.f32 %v626, %v629
      %vm631 = vweird.f32 %v571
      %vm632 = vweird.f32 %v626
      %vm633 = vmor %vm631, %vm632
      %v634 = vsel %vm633, %v626, %v630
      %v635 = vand.u32 2147483647, %v571
      %vm636 = vcmp.eq.f32.partialorder %v635, 8.507059e+37
      %v637 = vand.u32 %v571, 2147483648
      %v638 = vor.u32 1.1754944e-38, %v637
      %v639 = vsel %vm636, %v638, %v634
      %v640 = vrcp.pop %v573
      %v641 = vmul.f32 %v573, %v640
      %v642 = vsub.f32 1.0, %v641
      %v643 = vmul.f32 %v640, %v642
      %v644 = vadd.f32 %v640, %v643
      %vm645 = vweird.f32 %v573
      %vm646 = vweird.f32 %v640
      %vm647 = vmor %vm645, %vm646
      %v648 = vsel %vm647, %v640, %v644
      %v649 = vand.u32 2147483647, %v573
      %vm650 = vcmp.eq.f32.partialorder %v649, 8.507059e+37
      %v651 = vand.u32 %v573, 2147483648
      %v652 = vor.u32 1.1754944e-38, %v651
      %v653 = vsel %vm650, %v652, %v648
      %v654 = vrcp.pop %v575
      %v655 = vmul.f32 %v575, %v654
      %v656 = vsub.f32 1.0, %v655
      %v657 = vmul.f32 %v654, %v656
      %v658 = vadd.f32 %v654, %v657
      %vm659 = vweird.f32 %v575
      %vm660 = vweird.f32 %v654
      %vm661 = vmor %vm659, %vm660
      %v662 = vsel %vm661, %v654, %v658
      %v663 = vand.u32 2147483647, %v575
      %vm664 = vcmp.eq.f32.partialorder %v663, 8.507059e+37
      %v665 = vand.u32 %v575, 2147483648
      %v666 = vor.u32 1.1754944e-38, %v665
      %v667 = vsel %vm664, %v666, %v662
      %v668 = vrcp.pop %v577
      %v669 = vmul.f32 %v577, %v668
      %v670 = vsub.f32 1.0, %v669
      %v671 = vmul.f32 %v668, %v670
      %v672 = vadd.f32 %v668, %v671
      %vm673 = vweird.f32 %v577
      %vm674 = vweird.f32 %v668
      %vm675 = vmor %vm673, %vm674
      %v676 = vsel %vm675, %v668, %v672
      %v677 = vand.u32 2147483647, %v577
      %vm678 = vcmp.eq.f32.partialorder %v677, 8.507059e+37
      %v679 = vand.u32 %v577, 2147483648
      %v680 = vor.u32 1.1754944e-38, %v679
      %v681 = vsel %vm678, %v680, %v676
      %v682 = vrcp.pop %v579
      %v683 = vmul.f32 %v579, %v682
      %v684 = vsub.f32 1.0, %v683
      %v685 = vmul.f32 %v682, %v684
      %v686 = vadd.f32 %v682, %v685
      %vm687 = vweird.f32 %v579
      %vm688 = vweird.f32 %v682
      %vm689 = vmor %vm687, %vm688
      %v690 = vsel %vm689, %v682, %v686
      %v691 = vand.u32 2147483647, %v579
      %vm692 = vcmp.eq.f32.partialorder %v691, 8.507059e+37
      %v693 = vand.u32 %v579, 2147483648
      %v694 = vor.u32 1.1754944e-38, %v693
      %v695 = vsel %vm692, %v694, %v690
      %v696 = vrcp.pop %v581
      %v697 = vmul.f32 %v581, %v696
      %v698 = vsub.f32 1.0, %v697
      %v699 = vmul.f32 %v696, %v698
      %v700 = vadd.f32 %v696, %v699
      %vm701 = vweird.f32 %v581
      %vm702 = vweird.f32 %v696
      %vm703 = vmor %vm701, %vm702
      %v704 = vsel %vm703, %v696, %v700
      %v705 = vand.u32 2147483647, %v581
      %vm706 = vcmp.eq.f32.partialorder %v705, 8.507059e+37
      %v707 = vand.u32 %v581, 2147483648
      %v708 = vor.u32 1.1754944e-38, %v707
      %v709 = vsel %vm706, %v708, %v704
      %v710 = vrcp.pop %v583
      %v711 = vmul.f32 %v583, %v710
      %v712 = vsub.f32 1.0, %v711
      %v713 = vmul.f32 %v710, %v712
      %v714 = vadd.f32 %v710, %v713
      %vm715 = vweird.f32 %v583
      %vm716 = vweird.f32 %v710
      %vm717 = vmor %vm715, %vm716
      %v718 = vsel %vm717, %v710, %v714
      %v719 = vand.u32 2147483647, %v583
      %vm720 = vcmp.eq.f32.partialorder %v719, 8.507059e+37
      %v721 = vand.u32 %v583, 2147483648
      %v722 = vor.u32 1.1754944e-38, %v721
      %v723 = vsel %vm720, %v722, %v718
      %v724 = vrcp.pop %v585
      %v725 = vmul.f32 %v585, %v724
      %v726 = vsub.f32 1.0, %v725
      %v727 = vmul.f32 %v724, %v726
      %v728 = vadd.f32 %v724, %v727
      %vm729 = vweird.f32 %v585
      %vm730 = vweird.f32 %v724
      %vm731 = vmor %vm729, %vm730
      %v732 = vsel %vm731, %v724, %v728
      %v733 = vand.u32 2147483647, %v585
      %vm734 = vcmp.eq.f32.partialorder %v733, 8.507059e+37
      %v735 = vand.u32 %v585, 2147483648
      %v736 = vor.u32 1.1754944e-38, %v735
      %v737 = vsel %vm734, %v736, %v732
      %v738 = vrcp.pop %v587
      %v739 = vmul.f32 %v587, %v738
      %v740 = vsub.f32 1.0, %v739
      %v741 = vmul.f32 %v738, %v740
      %v742 = vadd.f32 %v738, %v741
      %vm743 = vweird.f32 %v587
      %vm744 = vweird.f32 %v738
      %vm745 = vmor %vm743, %vm744
      %v746 = vsel %vm745, %v738, %v742
      %v747 = vand.u32 2147483647, %v587
      %vm748 = vcmp.eq.f32.partialorder %v747, 8.507059e+37
      %v749 = vand.u32 %v587, 2147483648
      %v750 = vor.u32 1.1754944e-38, %v749
      %v751 = vsel %vm748, %v750, %v746
      %v752 = vrcp.pop %v589
      %v753 = vmul.f32 %v589, %v752
      %v754 = vsub.f32 1.0, %v753
      %v755 = vmul.f32 %v752, %v754
      %v756 = vadd.f32 %v752, %v755
      %vm757 = vweird.f32 %v589
      %vm758 = vweird.f32 %v752
      %vm759 = vmor %vm757, %vm758
      %v760 = vsel %vm759, %v752, %v756
      %v761 = vand.u32 2147483647, %v589
      %vm762 = vcmp.eq.f32.partialorder %v761, 8.507059e+37
      %v763 = vand.u32 %v589, 2147483648
      %v764 = vor.u32 1.1754944e-38, %v763
      %v765 = vsel %vm762, %v764, %v760
      %v766 = vrcp.pop %v591
      %v767 = vmul.f32 %v591, %v766
      %v768 = vsub.f32 1.0, %v767
      %v769 = vmul.f32 %v766, %v768
      %v770 = vadd.f32 %v766, %v769
      %vm771 = vweird.f32 %v591
      %vm772 = vweird.f32 %v766
      %vm773 = vmor %vm771, %vm772
      %v774 = vsel %vm773, %v766, %v770
      %v775 = vand.u32 2147483647, %v591
      %vm776 = vcmp.eq.f32.partialorder %v775, 8.507059e+37
      %v777 = vand.u32 %v591, 2147483648
      %v778 = vor.u32 1.1754944e-38, %v777
      %v779 = vsel %vm776, %v778, %v774
      %v780 = vrcp.pop %v593
      %v781 = vmul.f32 %v593, %v780
      %v782 = vsub.f32 1.0, %v781
      %v783 = vmul.f32 %v780, %v782
      %v784 = vadd.f32 %v780, %v783
      %vm785 = vweird.f32 %v593
      %vm786 = vweird.f32 %v780
      %vm787 = vmor %vm785, %vm786
      %v788 = vsel %vm787, %v780, %v784
      %v789 = vand.u32 2147483647, %v593
      %vm790 = vcmp.eq.f32.partialorder %v789, 8.507059e+37
      %v791 = vand.u32 %v593, 2147483648
      %v792 = vor.u32 1.1754944e-38, %v791
      %v793 = vsel %vm790, %v792, %v788
      %v794 = vrcp.pop %v595
      %v795 = vmul.f32 %v595, %v794
      %v796 = vsub.f32 1.0, %v795
      %v797 = vmul.f32 %v794, %v796
      %v798 = vadd.f32 %v794, %v797
      %vm799 = vweird.f32 %v595
      %vm800 = vweird.f32 %v794
      %vm801 = vmor %vm799, %vm800
      %v802 = vsel %vm801, %v794, %v798
      %v803 = vand.u32 2147483647, %v595
      %vm804 = vcmp.eq.f32.partialorder %v803, 8.507059e+37
      %v805 = vand.u32 %v595, 2147483648
      %v806 = vor.u32 1.1754944e-38, %v805
      %v807 = vsel %vm804, %v806, %v802
      %v808 = vrcp.pop %v597
      %v809 = vmul.f32 %v597, %v808
      %v810 = vsub.f32 1.0, %v809
      %v811 = vmul.f32 %v808, %v810
      %v812 = vadd.f32 %v808, %v811
      %vm813 = vweird.f32 %v597
      %vm814 = vweird.f32 %v808
      %vm815 = vmor %vm813, %vm814
      %v816 = vsel %vm815, %v808, %v812
      %v817 = vand.u32 2147483647, %v597
      %vm818 = vcmp.eq.f32.partialorder %v817, 8.507059e+37
      %v819 = vand.u32 %v597, 2147483648
      %v820 = vor.u32 1.1754944e-38, %v819
      %v821 = vsel %vm818, %v820, %v816
      %v822 = vmul.f32 %v535, %v611
      %v823 = vmul.f32 %v537, %v625
      %v824 = vmul.f32 %v539, %v639
      %v825 = vmul.f32 %v541, %v653
      %v826 = vmul.f32 %v543, %v667
      %v827 = vmul.f32 %v545, %v681
      %v828 = vmul.f32 %v547, %v695
      %v829 = vmul.f32 %v549, %v709
      %v830 = vmul.f32 %v551, %v723
      %v831 = vmul.f32 %v553, %v737
      %v832 = vmul.f32 %v555, %v751
      %v833 = vmul.f32 %v557, %v765
      %v834 = vmul.f32 %v559, %v779
      %v835 = vmul.f32 %v561, %v793
      %v836 = vmul.f32 %v563, %v807
      %v837 = vmul.f32 %v565, %v821
      %838 = vmatpush.msra.mxu0 %v837
      %839 = vmatpush.msra.mxu0 %v836
      %840 = vmatpush.msra.mxu0 %v835
      %841 = vmatpush.msra.mxu0 %v834
      %842 = vmatpush.msra.mxu0 %v833
      %843 = vmatpush.msra.mxu0 %v832
      %844 = vmatpush.msra.mxu0 %v831
      %845 = vmatpush.msra.mxu0 %v830
      %846 = vmatpush.msra.mxu0 %v829
      %847 = vmatpush.msra.mxu0 %v828
      %848 = vmatpush.msra.mxu0 %v827
      %849 = vmatpush.msra.mxu0 %v826
      %850 = vmatpush.msra.mxu0 %v825
      %851 = vmatpush.msra.mxu0 %v824
      %852 = vmatpush.msra.mxu0 %v823
      %853 = vmatpush.msra.mxu0 %v822
      %854 = vmatmul.f32.gmra.mxu0 %v282
      %v855 = vpop.f32.mrf.mxu0
      %v856 = vadd.f32 0.0, %v855
      %857 = vmatmul.f32.gmra.mxu0 %v283
      %v858 = vpop.f32.mrf.mxu0
      %v859 = vadd.f32 0.0, %v858
      %860 = vdwg.mxu0
      %s861 = sld [smem:[#allocation2]]
      %v862 = vstv %s861
      %v863 = vmul.f32 %v862, %v856
      %v864 = vmul.f32 %v862, %v859
      %v865 = vadd.f32 %v863, %v239
      %v866 = vadd.f32 %v864, %v240
      %867 = vst [vmem:[%s234] sm:$0xff] %v865
      %868 = vst [vmem:[%s234 + $0x8] sm:$0xff] %v866
      %p869 = scmp.lt.s32.totalorder %s20, 1
      %s870 = scalar_select %p869, %s20, 1
      %p871 = scmp.lt.s32.totalorder %s21, 1
      %s872 = scalar_select %p871, %s21, 1
      %s873 = smul.addr %s872, 2
      %s874 = smul.addr %s870, 4
      %s875 = sadd.s32 %s873, %s874
      %s876 = smul.addr %s875, 8
      %s877 = scalar_lea.vmem %s4, %s876
      // Predicated region
      $region37: #{self_attention_forward.1} parent=35 // pred_check
        %p878 = pneg %p139
      $region38: #{self_attention_forward.1} parent=35 // pred_check_branch
        %880 = sbr.rel (%p878) target = $region40
      $region39: #{self_attention_forward.1} parent=35 // pred_region
        _
      $region40: #{self_attention_forward.1} parent=35 // pred_fallthru
        _
    $region36: #{self_attention_forward.1} parent=5 // pred_fallthru
      _
    %p881 = scmp.le.s32.totalorder 2, %s11
    // Predicated region
    $region41: #{self_attention_forward.1} parent=5 // pred_check
      %p882 = pneg %p881
    $region42: #{self_attention_forward.1} parent=5 // pred_check_branch
      %884 = sbr.rel (%p882) target = $region44
    $region43: #{self_attention_forward.1} parent=5 // pred_region
      %s885 = ssub.s32 %s11, 2
      // Predicated region
      $region45: #{self_attention_forward.1} parent=43 // pred_check
        %p886 = pneg %p145
      $region46: #{self_attention_forward.1} parent=43 // pred_check_branch
        %888 = sbr.rel (%p886) target = $region48
      $region47: #{self_attention_forward.1} parent=43 // pred_region
        %p889 = scmp.lt.s32.totalorder %s22, 1
        %s890 = scalar_select %p889, %s22, 1
        %p891 = scmp.lt.s32.totalorder %s23, 1
        %s892 = scalar_select %p891, %s23, 1
        %s893 = smul.addr %s892, 2
        %s894 = smul.addr %s890, 4
        %s895 = sadd.s32 %s893, %s894
        %s896 = smul.addr %s895, 8
        %s897 = scalar_lea.vmem %s4, %s896
      $region48: #{self_attention_forward.1} parent=43 // pred_fallthru
        _
    $region44: #{self_attention_forward.1} parent=5 // pred_fallthru
      _
  $region6: #{self_attention_forward.1} parent=0 // loop_footer
    %s15 = sadd.s32 1, %s11
  $region7: #{self_attention_forward.1} parent=0 // loop_footer_branch
    %10 = sbr.rel target = $region3
  $region8: #{self_attention_forward.1} parent=0 // loop_exit
    _

</llo_original>
